<compile_context>
chip_gen: v7x
topology: tpu7x:2x2x1
jax: 0.10.0
libtpu: 0.0.40
codegen_flags: <defaults>
</compile_context>

<pallas_src>
import itertools
from math import comb as choose

import jax
import jax.numpy as jnp
import numpy as np
from jax.experimental import pallas as pl
from jax.experimental.pallas import tpu as pltpu


# ----------------------------- Pallas kernel ------------------------------ #
def boltzmann_kernel(params_ref, states_ref, wrong_ref, maskT_ref, thresh_ref,
                     coeffs_ref, out_ref):
    b = pl.program_id(0)
    beta = params_ref[0]          # runtime scalars from SMEM (no recompile on change)
    skew = params_ref[1]

    # counts[s, c] = how many of term c's selected variables are 1 in state s
    # (bf16 0/1 operands, f32 accumulation -> exact integers).  MXU.
    counts = jnp.dot(states_ref[...], maskT_ref[...],
                     preferred_element_type=jnp.float32)            # (S, Cp)

    # product of selected {0,1} bits == 1 iff all selected bits are 1
    terms = jnp.where(counts >= thresh_ref[...],
                      jnp.float32(1.0), jnp.float32(0.0))           # (S, Cp)

    # Hamiltonian: VPU multiply + lane reduction (padded coeffs are 0).
    energies = jnp.sum(terms * coeffs_ref[...],
                       axis=-1, keepdims=True)                      # (S, 1)

    # Stabilized Boltzmann factors: the max cancels in log(wrong)-log(all).
    z = -beta * energies                                            # (S, 1)
    m = jnp.max(z, axis=0, keepdims=True)                           # (1, 1)
    f = jnp.exp(z - m)                                              # (S, 1)
    all_sum = jnp.sum(f, axis=0, keepdims=True)                     # (1, 1)
    wrong_sum = jnp.sum(f * wrong_ref[...], axis=0, keepdims=True)  # (1, 1)
    # (If wrong_sum == 0 this gives exp(-inf) = 0, matching the torch module.)
    val = jnp.exp(skew * (jnp.log(wrong_sum) - jnp.log(all_sum)))   # (1, 1)

    # Accumulate this input's scalar into lane b of the resident, lane-dense
    # output tile.
    lane = jax.lax.broadcasted_iota(jnp.int32, out_ref.shape, 1)    # (8, 128)

    @pl.when(b == 0)
    def _():
        out_ref[...] = jnp.zeros_like(out_ref)

    out_ref[...] += val * (lane == b).astype(jnp.float32)


def boltzmann_forward(params, states, wrong, maskT, thresh, coeffs,
                      *, num_inputs, states_per_input):
    B, S = num_inputs, states_per_input
    N = states.shape[1]
    Cp = maskT.shape[1]
    assert states.shape[0] == B * S and wrong.shape == (B * S, 1)
    assert B <= 128, "results are written to lanes of one (8, 128) tile"

    grid_spec = pltpu.PrefetchScalarGridSpec(
        num_scalar_prefetch=0,
        grid=(B,),
        in_specs=[
            pl.BlockSpec(memory_space=pltpu.SMEM),            # (2,) beta, skew
            pl.BlockSpec((S, N), lambda b: (b, 0)),           # states of input b
            pl.BlockSpec((S, 1), lambda b: (b, 0)),           # wrong mask of input b
            pl.BlockSpec((N, Cp), lambda b: (0, 0)),          # selector mask (resident)
            pl.BlockSpec((1, Cp), lambda b: (0, 0)),          # thresholds   (resident)
            pl.BlockSpec((1, Cp), lambda b: (0, 0)),          # coefficients (resident)
        ],
        out_specs=pl.BlockSpec((8, 128), lambda b: (0, 0)),   # resident, lane-dense
    )
    return pl.pallas_call(
        boltzmann_kernel,
        out_shape=jax.ShapeDtypeStruct((8, 128), jnp.float32),
        grid_spec=grid_spec,
        compiler_params=pltpu.CompilerParams(
            dimension_semantics=("arbitrary",),
        ),
    )(params, states, wrong, maskT, thresh, coeffs)


# ------------------------------- glue (host) ------------------------------ #
def int_to_bits(x: int, b: int) -> np.ndarray:
    # little-endian bit order, matches torch `binary(x, b)`
    return np.array([(x >> i) & 1 for i in range(b)], dtype=np.float32)


def build_term_selectors(dimension: int, degree: int):
    """Selector mask (C, N) and per-term degree (C,) in torch.combinations order."""
    rows, degs = [], []
    for deg in range(1, degree + 1):
        for comb_idx in itertools.combinations(range(dimension), deg):
            row = np.zeros(dimension, dtype=np.float32)
            row[list(comb_idx)] = 1.0
            rows.append(row)
            degs.append(float(deg))
    return np.stack(rows), np.asarray(degs, dtype=np.float32)


def build_all_inputs(in_dim, out_dim, num_aux, answer_table):
    """States (B*S, N) and wrong mask (B*S, 1) for every input int, stacked."""
    B, S = 2 ** in_dim, 2 ** (out_dim + num_aux)
    N = in_dim + out_dim + num_aux
    states = np.zeros((B * S, N), dtype=np.float32)
    wrong = np.zeros((B * S, 1), dtype=np.float32)
    for inp in range(B):
        base = inp * S
        for idx, (out_val, aux_val) in enumerate(
                itertools.product(range(2 ** out_dim), range(2 ** num_aux))):
            states[base + idx] = np.concatenate([int_to_bits(inp, in_dim),
                                                 int_to_bits(out_val, out_dim),
                                                 int_to_bits(aux_val, num_aux)])
            wrong[base + idx, 0] = 1.0 if out_val != int(answer_table[inp]) else 0.0
    return states, wrong


def reference_forward(states_np, coeffs_np, wrong_np, degree, beta, skew):
    """Pure-numpy replica of the PyTorch semantics (explicit combination products)."""
    factors = []
    n = states_np.shape[1]
    for s in states_np:
        terms = []
        for deg in range(1, degree + 1):
            for comb_idx in itertools.combinations(range(n), deg):
                terms.append(np.prod(s[list(comb_idx)]))
        energy = np.dot(np.asarray(terms, dtype=np.float32), coeffs_np)
        factors.append(np.exp(-beta * energy))
    factors = np.asarray(factors, dtype=np.float32)
    all_sum = factors.sum()
    wrong_sum = (factors * wrong_np[:, 0]).sum()
    return np.exp(skew * (np.log(wrong_sum) - np.log(all_sum)))


# --------------------------------- main ----------------------------------- #
if __name__ == "__main__":
    # Small, forward-consistent sizes.
    in_dim, out_dim, num_aux = 3, 3, 2          # circuit.inspace.dim, outspace.dim, num_aux
    degree = 2                                  # Hamiltonian degree
    dimension = in_dim + out_dim + num_aux      # Hamiltonian dimension (N = 8)
    beta, skew = 1.0, 10.0
    B = 2 ** in_dim                             # all possible integer inputs (8)
    S = 2 ** (out_dim + num_aux)                # states per input level (32)

    # TODO(synk): PICircuit is not provided; synthesize a deterministic answer
    # table (input int -> correct output int) in its place.
    answer_table = np.array([(3 * i + 1) % (2 ** out_dim)
                             for i in range(B)], dtype=np.int32)

    num_coeffs = sum(choose(dimension, d) for d in range(1, degree + 1))  # C = 36
    key = jax.random.PRNGKey(0)
    coeffs_np = np.asarray(jax.random.normal(key, (num_coeffs,), dtype=jnp.float32))

    mask_np, degs_np = build_term_selectors(dimension, degree)            # (C,N), (C,)
    states_np, wrong_np = build_all_inputs(in_dim, out_dim, num_aux,
                                           answer_table)                  # (B*S,N), (B*S,1)

    # Pad the term axis to a lane-dense multiple of 128; padded coeffs are 0
    # (no contribution) and padded thresholds are huge (terms forced to 0).
    C = num_coeffs
    Cp = ((C + 127) // 128) * 128                                         # 128
    maskT_p = np.zeros((dimension, Cp), dtype=np.float32)
    maskT_p[:, :C] = mask_np.T
    thresh_p = np.full((1, Cp), 1e9, dtype=np.float32)
    thresh_p[0, :C] = degs_np - 0.5
    coeffs_p = np.zeros((1, Cp), dtype=np.float32)
    coeffs_p[0, :C] = coeffs_np

    params = jnp.asarray([beta, skew], dtype=jnp.float32)                 # (2,) SMEM
    states = jnp.asarray(states_np, dtype=jnp.bfloat16)                   # (256, 8)
    wrong = jnp.asarray(wrong_np, dtype=jnp.float32)                      # (256, 1)
    maskT = jnp.asarray(maskT_p, dtype=jnp.bfloat16)                      # (8, 128)
    thresh = jnp.asarray(thresh_p)                                        # (1, 128)
    coeffs = jnp.asarray(coeffs_p)                                        # (1, 128)

    out = boltzmann_forward(params, states, wrong, maskT, thresh, coeffs,
                            num_inputs=B, states_per_input=S)
    out = jax.block_until_ready(out)
    got = np.asarray(out)[0, :B]                                          # lane b = input b

    refs = np.array([reference_forward(states_np[b * S:(b + 1) * S],
                                       coeffs_np,
                                       wrong_np[b * S:(b + 1) * S],
                                       degree, beta, skew)
                     for b in range(B)], dtype=np.float32)
    np.testing.assert_allclose(got, refs, rtol=1e-4, atol=1e-6)

    print("KERNEL_OK")
</pallas_src>

<mosaic_0001>
module attributes {stable_mosaic.version = 11 : i64} {
  func.func @boltzmann_kernel(%arg0: i32, %arg1: memref<2xf32, #tpu.memory_space<smem>>, %arg2: memref<32x8xbf16, #tpu.memory_space<vmem>>, %arg3: memref<32x1xf32, #tpu.memory_space<vmem>>, %arg4: memref<8x128xbf16, #tpu.memory_space<vmem>>, %arg5: memref<1x128xf32, #tpu.memory_space<vmem>>, %arg6: memref<1x128xf32, #tpu.memory_space<vmem>>, %arg7: memref<8x128xf32, #tpu.memory_space<vmem>>) attributes {dimension_semantics = [#tpu.dimension_semantics<arbitrary>], iteration_bounds = array<i64: 8>, scalar_prefetch = 0 : i64, scratch_operands = 0 : i64, tpu.core_type = #tpu.core_type<tc>, window_params = [{transform_indices = @transform_0, window_bounds = array<i64: 2>}, {transform_indices = @transform_1, window_bounds = array<i64: 32, 8>}, {transform_indices = @transform_2, window_bounds = array<i64: 32, 1>}, {pipeline_mode = #tpu.pipeline_mode<synchronous>, transform_indices = @transform_3, window_bounds = array<i64: 8, 128>}, {pipeline_mode = #tpu.pipeline_mode<synchronous>, transform_indices = @transform_4, window_bounds = array<i64: 1, 128>}, {pipeline_mode = #tpu.pipeline_mode<synchronous>, transform_indices = @transform_5, window_bounds = array<i64: 1, 128>}, {pipeline_mode = #tpu.pipeline_mode<synchronous>, transform_indices = @transform_6, window_bounds = array<i64: 8, 128>}]} {
    %c0 = arith.constant 0 : index
    %0 = memref.load %arg1[%c0] : memref<2xf32, #tpu.memory_space<smem>>
    %c1 = arith.constant 1 : index
    %1 = memref.load %arg1[%c1] : memref<2xf32, #tpu.memory_space<smem>>
    %c0_0 = arith.constant 0 : index
    %c0_1 = arith.constant 0 : index
    %2 = vector.load %arg2[%c0_0, %c0_1] : memref<32x8xbf16, #tpu.memory_space<vmem>>, vector<32x8xbf16>
    %c0_2 = arith.constant 0 : index
    %c0_3 = arith.constant 0 : index
    %3 = vector.load %arg4[%c0_2, %c0_3] : memref<8x128xbf16, #tpu.memory_space<vmem>>, vector<8x128xbf16>
    %cst = arith.constant dense<0.000000e+00> : vector<32x128xf32>
    %4 = tpu.matmul %2, %3, %cst {dimension_numbers = #tpu.dot_dimension_numbers<[1], [0], [0], [1], [0, 0, 1, 1], [], []>} : vector<32x8xbf16>, vector<8x128xbf16>, vector<32x128xf32> -> vector<32x128xf32>
    %c0_4 = arith.constant 0 : index
    %c0_5 = arith.constant 0 : index
    %5 = vector.load %arg5[%c0_4, %c0_5] : memref<1x128xf32, #tpu.memory_space<vmem>>, vector<1x128xf32>
    %6 = vector.broadcast %5 : vector<1x128xf32> to vector<32x128xf32>
    %7 = arith.cmpf oge, %4, %6 : vector<32x128xf32>
    %cst_6 = arith.constant 1.000000e+00 : f32
    %cst_7 = arith.constant 0.000000e+00 : f32
    %8 = vector.broadcast %cst_6 : f32 to vector<32x128xf32>
    %9 = vector.broadcast %cst_7 : f32 to vector<32x128xf32>
    %10 = arith.select %7, %8, %9 : vector<32x128xi1>, vector<32x128xf32>
    %c0_8 = arith.constant 0 : index
    %c0_9 = arith.constant 0 : index
    %11 = vector.load %arg6[%c0_8, %c0_9] : memref<1x128xf32, #tpu.memory_space<vmem>>, vector<1x128xf32>
    %12 = vector.broadcast %11 : vector<1x128xf32> to vector<32x128xf32>
    %13 = arith.mulf %10, %12 : vector<32x128xf32>
    %cst_10 = arith.constant dense<0.000000e+00> : vector<32xf32>
    %14 = vector.multi_reduction <add>, %13, %cst_10 [1] : vector<32x128xf32> to vector<32xf32>
    %15 = vector.shape_cast %14 : vector<32xf32> to vector<32x1xf32>
    %cst_11 = arith.constant 0.000000e+00 : f32
    %16 = arith.subf %cst_11, %0 : f32
    %17 = vector.broadcast %16 : f32 to vector<32x1xf32>
    %18 = arith.mulf %17, %15 : vector<32x1xf32>
    %cst_12 = arith.constant dense<0xFF800000> : vector<1xf32>
    %19 = vector.multi_reduction <maximumf>, %18, %cst_12 [0] : vector<32x1xf32> to vector<1xf32>
    %20 = vector.shape_cast %19 : vector<1xf32> to vector<1x1xf32>
    %21 = vector.broadcast %20 : vector<1x1xf32> to vector<32x1xf32>
    %22 = arith.subf %18, %21 : vector<32x1xf32>
    %23 = math.exp %22 : vector<32x1xf32>
    %cst_13 = arith.constant dense<0.000000e+00> : vector<1xf32>
    %24 = vector.multi_reduction <add>, %23, %cst_13 [0] : vector<32x1xf32> to vector<1xf32>
    %25 = vector.shape_cast %24 : vector<1xf32> to vector<1x1xf32>
    %c0_14 = arith.constant 0 : index
    %c0_15 = arith.constant 0 : index
    %26 = vector.load %arg3[%c0_14, %c0_15] : memref<32x1xf32, #tpu.memory_space<vmem>>, vector<32x1xf32>
    %27 = arith.mulf %23, %26 : vector<32x1xf32>
    %cst_16 = arith.constant dense<0.000000e+00> : vector<1xf32>
    %28 = vector.multi_reduction <add>, %27, %cst_16 [0] : vector<32x1xf32> to vector<1xf32>
    %29 = vector.shape_cast %28 : vector<1xf32> to vector<1x1xf32>
    %30 = math.log %29 : vector<1x1xf32>
    %31 = math.log %25 : vector<1x1xf32>
    %32 = arith.subf %30, %31 : vector<1x1xf32>
    %33 = vector.broadcast %1 : f32 to vector<1x1xf32>
    %34 = arith.mulf %33, %32 : vector<1x1xf32>
    %35 = math.exp %34 : vector<1x1xf32>
    %36 = tpu.iota {dimensions = array<i32: 1>} : vector<8x128xi32>
    %c0_i32 = arith.constant 0 : i32
    %37 = arith.cmpi eq, %arg0, %c0_i32 : i32
    %38 = arith.extui %37 : i1 to i32
    %c0_i32_17 = arith.constant 0 : i32
    %39 = arith.cmpi ne, %38, %c0_i32_17 : i32
    scf.if %39 {
      %cst_22 = arith.constant 0.000000e+00 : f32
      %49 = vector.broadcast %cst_22 : f32 to vector<8x128xf32>
      %c0_23 = arith.constant 0 : index
      %c0_24 = arith.constant 0 : index
      %50 = vector.load %arg7[%c0_23, %c0_24] : memref<8x128xf32, #tpu.memory_space<vmem>>, vector<8x128xf32>
      tpu.vector_store %arg7[%c0_23, %c0_24], %49 {strides = array<i32>} : memref<8x128xf32, #tpu.memory_space<vmem>>, vector<8x128xf32>,
    } else {
    }
    %c0_18 = arith.constant 0 : index
    %c0_19 = arith.constant 0 : index
    %40 = vector.load %arg7[%c0_18, %c0_19] : memref<8x128xf32, #tpu.memory_space<vmem>>, vector<8x128xf32>
    %41 = vector.broadcast %arg0 : i32 to vector<8x128xi32>
    %42 = arith.cmpi eq, %36, %41 : vector<8x128xi32>
    %43 = arith.extui %42 : vector<8x128xi1> to vector<8x128xi32>
    %44 = arith.sitofp %43 : vector<8x128xi32> to vector<8x128xf32>
    %45 = vector.broadcast %35 : vector<1x1xf32> to vector<8x128xf32>
    %46 = arith.mulf %45, %44 : vector<8x128xf32>
    %47 = arith.addf %40, %46 : vector<8x128xf32>
    %c0_20 = arith.constant 0 : index
    %c0_21 = arith.constant 0 : index
    %48 = vector.load %arg7[%c0_20, %c0_21] : memref<8x128xf32, #tpu.memory_space<vmem>>, vector<8x128xf32>
    tpu.vector_store %arg7[%c0_20, %c0_21], %47 {strides = array<i32>} : memref<8x128xf32, #tpu.memory_space<vmem>>, vector<8x128xf32>,
    return
  }
  func.func @transform_0(%arg0: i32) -> i32 {
    %c0_i32 = arith.constant 0 : i32
    %c0_i32_0 = arith.constant 0 : i32
    return %c0_i32 : i32
  }
  func.func @transform_1(%arg0: i32) -> (i32, i32) {
    %c0_i32 = arith.constant 0 : i32
    %c0_i32_0 = arith.constant 0 : i32
    return %arg0, %c0_i32 : i32, i32
  }
  func.func @transform_2(%arg0: i32) -> (i32, i32) {
    %c0_i32 = arith.constant 0 : i32
    %c0_i32_0 = arith.constant 0 : i32
    return %arg0, %c0_i32 : i32, i32
  }
  func.func @transform_3(%arg0: i32) -> (i32, i32) {
    %c0_i32 = arith.constant 0 : i32
    %c0_i32_0 = arith.constant 0 : i32
    %c0_i32_1 = arith.constant 0 : i32
    return %c0_i32, %c0_i32_0 : i32, i32
  }
  func.func @transform_4(%arg0: i32) -> (i32, i32) {
    %c0_i32 = arith.constant 0 : i32
    %c0_i32_0 = arith.constant 0 : i32
    %c0_i32_1 = arith.constant 0 : i32
    return %c0_i32, %c0_i32_0 : i32, i32
  }
  func.func @transform_5(%arg0: i32) -> (i32, i32) {
    %c0_i32 = arith.constant 0 : i32
    %c0_i32_0 = arith.constant 0 : i32
    %c0_i32_1 = arith.constant 0 : i32
    return %c0_i32, %c0_i32_0 : i32, i32
  }
  func.func @transform_6(%arg0: i32) -> (i32, i32) {
    %c0_i32 = arith.constant 0 : i32
    %c0_i32_0 = arith.constant 0 : i32
    %c0_i32_1 = arith.constant 0 : i32
    return %c0_i32, %c0_i32_0 : i32, i32
  }
}

</mosaic_0001>

<llo_original>
// kernel: tpu_custom_call.1
$region0: #{tpu_custom_call.1}
  #allocation0 [shape = 'u32[]', space=smem, size = 0x4, offset = 0x4, fixed_abs, tag = 'smem constant byte address 0x4 - core index']
  #allocation1 [shape = 'u32[144,128]{1,0:T(1,128)}', space=vmem, size = 0x12000, scoped, tag = 'internal scratch']
  %s0 = inlined_call_operand.vmem [shape: f32[2], index: 0, kind: input, shape index: {}]
  %s1 = inlined_call_operand.vmem [shape: bf16[256,8], index: 1, kind: input, shape index: {}]
  %s2 = inlined_call_operand.vmem [shape: f32[256,1], index: 2, kind: input, shape index: {}]
  %s3 = inlined_call_operand.vmem [shape: bf16[8,128], index: 3, kind: input, shape index: {}]
  %s4 = inlined_call_operand.vmem [shape: f32[1,128], index: 4, kind: input, shape index: {}]
  %s5 = inlined_call_operand.vmem [shape: f32[1,128], index: 5, kind: input, shape index: {}]
  %s6 = inlined_call_operand.hbm [shape: f32[8,128], index: 6, kind: output, shape index: {}]
  %s7 = sld [smem:[#allocation0]]
  $region65: #{tpu_custom_call.1} parent=0
    _
  %s9 = ssub.s32 1, %s7
  %s10 = scalar_select 0, %s9, %s7
  $region1: #{tpu_custom_call.1} parent=0
    #allocation2 [shape = 'u8[512]{0}', space=smem, size = 0x200, scoped, tag = 'input window, operand 0, single buffered']
    #allocation3 [shape = 's32[2]{0}', space=sflag, size = 0x8, scoped, tag = 'scoped memory for tpu_custom_call.1']
    #allocation4 [shape = 's32[2]{0}', space=sflag, size = 0x8, scoped, tag = 'scoped memory for tpu_custom_call.1']
    #allocation5 [shape = 'u8[4096]{0}', space=vmem, size = 0x1000, scoped, tag = 'output window, operand 0, single buffered']
    %11 = vsyncpa [#allocation4], 0
    %12 = vsyncpa [#allocation3], 0
    loop: start=0, step=1, limit=10
    $region2: #{tpu_custom_call.1} parent=1 // loop_pre_header
      _
    $region3: #{tpu_custom_call.1} parent=1 // loop_header
      %s14 = sphi 0, %s18
      %p15 = scmp.ge.s32.totalorder %s14, 10
      %s22 = sphi 0, %s22
      %s24 = sphi 0, %s22
      %s25 = sphi 0, %s24
      %s39 = sphi 0, %s25
      %s45 = sphi 0, %s47
      %s48 = sphi 0, %s45
      %s49 = sphi 0, %s48
      %s65 = sphi 0, %s49
      %s71 = sphi 0, %s73
      %s74 = sphi 0, %s71
      %s75 = sphi 0, %s74
      %s91 = sphi 0, %s75
      %s95 = sphi 0, %s95
      %s97 = sphi 0, %s95
      %s98 = sphi 0, %s97
      %s112 = sphi 0, %s98
      %s116 = sphi 0, %s116
      %s118 = sphi 0, %s116
      %s119 = sphi 0, %s118
      %s133 = sphi 0, %s119
      %s137 = sphi 0, %s137
      %s139 = sphi 0, %s137
      %s140 = sphi 0, %s139
      %s154 = sphi 0, %s140
      %s158 = sphi 0, %s158
      %s160 = sphi 0, %s158
      %s161 = sphi 0, %s160
      %s175 = sphi 0, %s161
    $region4: #{tpu_custom_call.1} parent=1 // loop_header_branch
      %17 = sbr.rel (%p15) target = $region8
    $region5: #{tpu_custom_call.1} parent=1 // loop_body
      %s19 = ssub.s32 %s14, 1
      %s20 = ssub.s32 %s14, 2
      %s21 = sadd.s32 %s14, 1
      %s23 = sadd.s32 %s22, 1
      %p26 = scmp.eq.s32.totalorder %s14, 7
      %p27 = scmp.ne.s32.totalorder %s22, %s24
      %p28 = scmp.eq.s32.totalorder %s14, 0
      %p29 = por %p27, %p28
      %p30 = scmp.ne.s32.totalorder %s22, %s24
      %p31 = scmp.eq.s32.totalorder %s19, 7
      %p32 = por %p30, %p31
      %p33 = scmp.ne.s32.totalorder %s24, %s25
      %p34 = scmp.eq.s32.totalorder %s19, 0
      %p35 = por %p33, %p34
      %p36 = scmp.ne.s32.totalorder %s24, %s25
      %p37 = scmp.eq.s32.totalorder %s20, 7
      %p38 = por %p36, %p37
      %p40 = scmp.ne.s32.totalorder %s25, %s39
      %p41 = scmp.eq.s32.totalorder %s20, 0
      %p42 = por %p40, %p41
      %s43 = ssub.s32 %s14, %s21
      %p44 = scmp.eq.s32.totalorder %s43, 0
      %s46 = sadd.s32 %s45, 1
      %s47 = scalar_select %p44, %s45, %s46
      %p50 = pneg %p44
      %p51 = scmp.eq.s32.totalorder %s14, 7
      %p52 = por %p50, %p51
      %p53 = scmp.ne.s32.totalorder %s45, %s48
      %p54 = scmp.eq.s32.totalorder %s14, 0
      %p55 = por %p53, %p54
      %p56 = scmp.ne.s32.totalorder %s45, %s48
      %p57 = scmp.eq.s32.totalorder %s19, 7
      %p58 = por %p56, %p57
      %p59 = scmp.ne.s32.totalorder %s48, %s49
      %p60 = scmp.eq.s32.totalorder %s19, 0
      %p61 = por %p59, %p60
      %p62 = scmp.ne.s32.totalorder %s48, %s49
      %p63 = scmp.eq.s32.totalorder %s20, 7
      %p64 = por %p62, %p63
      %p66 = scmp.ne.s32.totalorder %s49, %s65
      %p67 = scmp.eq.s32.totalorder %s20, 0
      %p68 = por %p66, %p67
      %s69 = ssub.s32 %s14, %s21
      %p70 = scmp.eq.s32.totalorder %s69, 0
      %s72 = sadd.s32 %s71, 1
      %s73 = scalar_select %p70, %s71, %s72
      %p76 = pneg %p70
      %p77 = scmp.eq.s32.totalorder %s14, 7
      %p78 = por %p76, %p77
      %p79 = scmp.ne.s32.totalorder %s71, %s74
      %p80 = scmp.eq.s32.totalorder %s14, 0
      %p81 = por %p79, %p80
      %p82 = scmp.ne.s32.totalorder %s71, %s74
      %p83 = scmp.eq.s32.totalorder %s19, 7
      %p84 = por %p82, %p83
      %p85 = scmp.ne.s32.totalorder %s74, %s75
      %p86 = scmp.eq.s32.totalorder %s19, 0
      %p87 = por %p85, %p86
      %p88 = scmp.ne.s32.totalorder %s74, %s75
      %p89 = scmp.eq.s32.totalorder %s20, 7
      %p90 = por %p88, %p89
      %p92 = scmp.ne.s32.totalorder %s75, %s91
      %p93 = scmp.eq.s32.totalorder %s20, 0
      %p94 = por %p92, %p93
      %s96 = sadd.s32 %s95, 1
      %p99 = scmp.eq.s32.totalorder %s14, 7
      %p100 = scmp.ne.s32.totalorder %s95, %s97
      %p101 = scmp.eq.s32.totalorder %s14, 0
      %p102 = por %p100, %p101
      %p103 = scmp.ne.s32.totalorder %s95, %s97
      %p104 = scmp.eq.s32.totalorder %s19, 7
      %p105 = por %p103, %p104
      %p106 = scmp.ne.s32.totalorder %s97, %s98
      %p107 = scmp.eq.s32.totalorder %s19, 0
      %p108 = por %p106, %p107
      %p109 = scmp.ne.s32.totalorder %s97, %s98
      %p110 = scmp.eq.s32.totalorder %s20, 7
      %p111 = por %p109, %p110
      %p113 = scmp.ne.s32.totalorder %s98, %s112
      %p114 = scmp.eq.s32.totalorder %s20, 0
      %p115 = por %p113, %p114
      %s117 = sadd.s32 %s116, 1
      %p120 = scmp.eq.s32.totalorder %s14, 7
      %p121 = scmp.ne.s32.totalorder %s116, %s118
      %p122 = scmp.eq.s32.totalorder %s14, 0
      %p123 = por %p121, %p122
      %p124 = scmp.ne.s32.totalorder %s116, %s118
      %p125 = scmp.eq.s32.totalorder %s19, 7
      %p126 = por %p124, %p125
      %p127 = scmp.ne.s32.totalorder %s118, %s119
      %p128 = scmp.eq.s32.totalorder %s19, 0
      %p129 = por %p127, %p128
      %p130 = scmp.ne.s32.totalorder %s118, %s119
      %p131 = scmp.eq.s32.totalorder %s20, 7
      %p132 = por %p130, %p131
      %p134 = scmp.ne.s32.totalorder %s119, %s133
      %p135 = scmp.eq.s32.totalorder %s20, 0
      %p136 = por %p134, %p135
      %s138 = sadd.s32 %s137, 1
      %p141 = scmp.eq.s32.totalorder %s14, 7
      %p142 = scmp.ne.s32.totalorder %s137, %s139
      %p143 = scmp.eq.s32.totalorder %s14, 0
      %p144 = por %p142, %p143
      %p145 = scmp.ne.s32.totalorder %s137, %s139
      %p146 = scmp.eq.s32.totalorder %s19, 7
      %p147 = por %p145, %p146
      %p148 = scmp.ne.s32.totalorder %s139, %s140
      %p149 = scmp.eq.s32.totalorder %s19, 0
      %p150 = por %p148, %p149
      %p151 = scmp.ne.s32.totalorder %s139, %s140
      %p152 = scmp.eq.s32.totalorder %s20, 7
      %p153 = por %p151, %p152
      %p155 = scmp.ne.s32.totalorder %s140, %s154
      %p156 = scmp.eq.s32.totalorder %s20, 0
      %p157 = por %p155, %p156
      %s159 = sadd.s32 %s158, 1
      %p162 = scmp.eq.s32.totalorder %s14, 7
      %p163 = scmp.ne.s32.totalorder %s158, %s160
      %p164 = scmp.eq.s32.totalorder %s14, 0
      %p165 = por %p163, %p164
      %p166 = scmp.ne.s32.totalorder %s158, %s160
      %p167 = scmp.eq.s32.totalorder %s19, 7
      %p168 = por %p166, %p167
      %p169 = scmp.ne.s32.totalorder %s160, %s161
      %p170 = scmp.eq.s32.totalorder %s19, 0
      %p171 = por %p169, %p170
      %p172 = scmp.ne.s32.totalorder %s160, %s161
      %p173 = scmp.eq.s32.totalorder %s20, 7
      %p174 = por %p172, %p173
      %p176 = scmp.ne.s32.totalorder %s161, %s175
      %p177 = scmp.eq.s32.totalorder %s20, 0
      %p178 = por %p176, %p177
      %p179 = scmp.le.s32.totalorder 1, %s14
      %p180 = scmp.lt.s32.totalorder %s14, 9
      %p181 = pnand %p179, %p180
      %p182 = pneg %p181
      // Predicated region
      $region9: #{tpu_custom_call.1} parent=5 // pred_check
        _
      $region10: #{tpu_custom_call.1} parent=5 // pred_check_branch
        %184 = sbr.rel (%p181) target = $region12
      $region11: #{tpu_custom_call.1} parent=5 // pred_region
        %s185 = ssub.s32 %s14, 1
        // Predicated region
        $region13: #{tpu_custom_call.1} parent=11 // pred_check
          %p186 = pneg %p35
        $region14: #{tpu_custom_call.1} parent=11 // pred_check_branch
          %188 = sbr.rel (%p186) target = $region16
        $region15: #{tpu_custom_call.1} parent=11 // pred_region
          %s190 = ssub.s32 16, 16
          %191 = vsyncadd [#allocation4], %s190
          %s193 = sshll.u32 %s0, 4
          %s194 = int_to_ptr.vmem [resolvable:$true] %s193
          %196 = dma.vmem_to_smem %s194, 16, [#allocation2], [#allocation4]
        $region16: #{tpu_custom_call.1} parent=11 // pred_fallthru
          _
        // Predicated region
        $region17: #{tpu_custom_call.1} parent=11 // pred_check
          %p197 = pneg %p108
        $region18: #{tpu_custom_call.1} parent=11 // pred_check_branch
          %199 = sbr.rel (%p197) target = $region20
        $region19: #{tpu_custom_call.1} parent=11 // pred_region
          _
        $region20: #{tpu_custom_call.1} parent=11 // pred_fallthru
          _
        // Predicated region
        $region21: #{tpu_custom_call.1} parent=11 // pred_check
          %p200 = pneg %p129
        $region22: #{tpu_custom_call.1} parent=11 // pred_check_branch
          %202 = sbr.rel (%p200) target = $region24
        $region23: #{tpu_custom_call.1} parent=11 // pred_region
          _
        $region24: #{tpu_custom_call.1} parent=11 // pred_fallthru
          _
        // Predicated region
        $region25: #{tpu_custom_call.1} parent=11 // pred_check
          %p203 = pneg %p150
        $region26: #{tpu_custom_call.1} parent=11 // pred_check_branch
          %205 = sbr.rel (%p203) target = $region28
        $region27: #{tpu_custom_call.1} parent=11 // pred_region
          _
        $region28: #{tpu_custom_call.1} parent=11 // pred_fallthru
          _
      $region12: #{tpu_custom_call.1} parent=5 // pred_fallthru
        _
      %p206 = scmp.lt.s32.totalorder %s14, 8
      // Predicated region
      $region29: #{tpu_custom_call.1} parent=5 // pred_check
        %p207 = pneg %p206
      $region30: #{tpu_custom_call.1} parent=5 // pred_check_branch
        %209 = sbr.rel (%p207) target = $region32
      $region31: #{tpu_custom_call.1} parent=5 // pred_region
        // Predicated region
        $region33: #{tpu_custom_call.1} parent=31 // pred_check
          %p210 = pneg %p55
        $region34: #{tpu_custom_call.1} parent=31 // pred_check_branch
          %212 = sbr.rel (%p210) target = $region36
        $region35: #{tpu_custom_call.1} parent=31 // pred_region
          %s213 = smul.u32 4, %s14
          %p214 = scmp.lt.s32.totalorder %s213, 31
          %s215 = scalar_select %p214, %s213, 31
          %s216 = smul.addr %s215, 4
          %s217 = scalar_lea.vmem %s1, %s216
          %s218 = smul.u32 4, %s14
        $region36: #{tpu_custom_call.1} parent=31 // pred_fallthru
          _
        // Predicated region
        $region37: #{tpu_custom_call.1} parent=31 // pred_check
          %p219 = pneg %p81
        $region38: #{tpu_custom_call.1} parent=31 // pred_check_branch
          %221 = sbr.rel (%p219) target = $region40
        $region39: #{tpu_custom_call.1} parent=31 // pred_region
          %s222 = smul.u32 4, %s14
          %p223 = scmp.lt.s32.totalorder %s222, 31
          %s224 = scalar_select %p223, %s222, 31
          %s225 = smul.addr %s224, 8
          %s226 = scalar_lea.vmem %s2, %s225
          %s227 = smul.u32 4, %s14
        $region40: #{tpu_custom_call.1} parent=31 // pred_fallthru
          _
      $region32: #{tpu_custom_call.1} parent=5 // pred_fallthru
        _
      %p228 = scmp.le.s32.totalorder 1, %s14
      %p229 = scmp.lt.s32.totalorder %s14, 9
      %p230 = pnand %p228, %p229
      %p231 = pneg %p230
      // Predicated region
      $region41: #{tpu_custom_call.1} parent=5 // pred_check
        _
      $region42: #{tpu_custom_call.1} parent=5 // pred_check_branch
        %233 = sbr.rel (%p230) target = $region44
      $region43: #{tpu_custom_call.1} parent=5 // pred_region
        %s234 = ssub.s32 %s14, 1
        // Predicated region
        $region45: #{tpu_custom_call.1} parent=43 // pred_check
          %p235 = pneg %p35
        $region46: #{tpu_custom_call.1} parent=43 // pred_check_branch
          %237 = sbr.rel (%p235) target = $region48
        $region47: #{tpu_custom_call.1} parent=43 // pred_region
          %238 = dma.done [#allocation4], 16
        $region48: #{tpu_custom_call.1} parent=43 // pred_fallthru
          _
        %239 = sfence
        %p240 = pneg %p35
        %p241 = pneg %p32
        %s242 = smul.u32 4, %s19
        %p243 = scmp.lt.s32.totalorder %s242, 31
        %s244 = scalar_select %p243, %s242, 31
        %s245 = smul.addr %s244, 4
        %s246 = scalar_lea.vmem %s1, %s245
        %p247 = pneg %p61
        %p248 = pneg %p58
        %s249 = smul.u32 4, %s19
        %p250 = scmp.lt.s32.totalorder %s249, 31
        %s251 = scalar_select %p250, %s249, 31
        %s252 = smul.addr %s251, 8
        %s253 = scalar_lea.vmem %s2, %s252
        %p254 = pneg %p87
        %p255 = pneg %p84
        %p256 = pneg %p108
        %p257 = pneg %p105
        %p258 = pneg %p129
        %p259 = pneg %p126
        %p260 = pneg %p150
        %p261 = pneg %p147
        %p262 = pneg %p171
        %p263 = pneg %p168
        %s264 = smul.u32 4, %s19
        %p265 = scmp.lt.s32.totalorder %s264, 31
        %s266 = scalar_select %p265, %s264, 31
        %s267 = smul.addr %s266, 4
        %s268 = scalar_lea.vmem %s1, %s267
        %s269 = smul.u32 4, %s19
        %s270 = smul.u32 4, %s19
        %p271 = scmp.lt.s32.totalorder %s270, 31
        %s272 = scalar_select %p271, %s270, 31
        %s273 = smul.addr %s272, 8
        %s274 = scalar_lea.vmem %s2, %s273
        %s275 = smul.u32 4, %s19
        %s277 = sld [smem:[#allocation2]]
        %s278 = sld [smem:[#allocation2 + $0x1]]
        %v279 = vld [vmem:[%s268] sm:$0xf]
        %v280 = vld [vmem:[%s268 + $0x4] sm:$0xf]
        %v281 = vld [vmem:[%s268 + $0x8] sm:$0xf]
        %v282 = vld [vmem:[%s268 + $0xc] sm:$0xf]
        %v283 = vld [vmem:[%s3] sm:$0xf]
        %v288 = vunpack.c.l.b16 %v279
        %v289 = vunpack.c.l.b16 %v280
        %v290 = vunpack.c.l.b16 %v281
        %v291 = vunpack.c.l.b16 %v282
        %v292 = vpack.c.b16 %v289, %v288
        %v293 = vpack.c.b16 %v291, %v290
        %vm294 = vcmask 64512
        %v296 = vsel %vm294, %v292, 0
        %v299 = vsel %vm294, %v293, 0
        %vm301 = vcmask 1043456
        %v303 = vsel %vm301, %v283, 0
        %305 = vmatprep.subr.bf16.mxu0 0
        %306 = vmatpush1.bf16.msra.mxu0 %v303
        %307 = vmatprep.subr.bf16.mxu0 0
        %308 = vmatpush1.bf16.msra.mxu0 0
        %309 = vmatprep.subr.bf16.mxu0 0
        %310 = vmatpush1.bf16.msra.mxu0 0
        %311 = vmatprep.subr.bf16.mxu0 0
        %312 = vmatpush1.bf16.msra.mxu0 0
        %313 = vmatprep.subr.bf16.mxu0 0
        %314 = vmatpush1.bf16.msra.mxu0 0
        %315 = vmatprep.subr.bf16.mxu0 0
        %316 = vmatpush1.bf16.msra.mxu0 0
        %317 = vmatprep.subr.bf16.mxu0 0
        %318 = vmatpush1.bf16.msra.mxu0 0
        %319 = vmatprep.subr.bf16.mxu0 0
        %320 = vmatpush1.bf16.msra.mxu0 0
        %321 = vmatprep.subr.bf16.mxu0 0
        %322 = vmatpush1.bf16.msra.mxu0 0
        %323 = vmatprep.subr.bf16.mxu0 0
        %324 = vmatpush1.bf16.msra.mxu0 0
        %325 = vmatprep.subr.bf16.mxu0 0
        %326 = vmatpush1.bf16.msra.mxu0 0
        %327 = vmatprep.subr.bf16.mxu0 0
        %328 = vmatpush1.bf16.msra.mxu0 0
        %329 = vmatprep.subr.bf16.mxu0 0
        %330 = vmatpush1.bf16.msra.mxu0 0
        %331 = vmatprep.subr.bf16.mxu0 0
        %332 = vmatpush1.bf16.msra.mxu0 0
        %333 = vmatprep.subr.bf16.mxu0 0
        %334 = vmatpush1.bf16.msra.mxu0 0
        %335 = vmatprep.subr.bf16.mxu0 0
        %336 = vmatpush1.bf16.msra.mxu0 0
        %337 = vmatprep.mubr.bf16.mxu0 0
        %338 = vmatmul.mubr.bf16.gmra.mrb[0].mxu0 %v296
        %v339 = vpop.f32.mrb[0].mxu0
        %v340 = vadd.f32 0.0, %v339
        %v341 = vpop.f32.mrb[0].mxu0
        %v342 = vpop.f32.mrb[0].mxu0
        %v343 = vadd.f32 0.0, %v342
        %v344 = vpop.f32.mrb[0].mxu0
        %345 = vmatprep.mubr.bf16.mxu0 0
        %346 = vmatmul.mubr.bf16.gmra.mrb[0].mxu0 %v299
        %v347 = vpop.f32.mrb[0].mxu0
        %v348 = vadd.f32 0.0, %v347
        %v349 = vpop.f32.mrb[0].mxu0
        %v350 = vpop.f32.mrb[0].mxu0
        %v351 = vadd.f32 0.0, %v350
        %v352 = vpop.f32.mrb[0].mxu0
        %353 = vdwg.mxu0
        %v354 = vld [vmem:[%s4] sm:$0x1]
        %v356 = vlaneseq
        %v357 = vshrl.u32 %v356, 7
        %v358 = vsub.s32 0, %v357
        %v359 = vrot.slane %v354, %v358
        %vm361 = vcmp.ge.f32.partialorder %v340, %v359
        %vm362 = vcmp.ge.f32.partialorder %v343, %v359
        %vm363 = vcmp.ge.f32.partialorder %v348, %v359
        %vm364 = vcmp.ge.f32.partialorder %v351, %v359
        %v365 = vsel %vm361, 1.0, 0.0
        %v366 = vsel %vm362, 1.0, 0.0
        %v367 = vsel %vm363, 1.0, 0.0
        %v368 = vsel %vm364, 1.0, 0.0
        %v369 = vld [vmem:[%s5] sm:$0x1]
        %v371 = vlaneseq
        %v372 = vshrl.u32 %v371, 7
        %v373 = vsub.s32 0, %v372
        %v374 = vrot.slane %v369, %v373
        %v376 = vmul.f32 %v365, %v374
        %v377 = vmul.f32 %v366, %v374
        %v378 = vmul.f32 %v367, %v374
        %v379 = vmul.f32 %v368, %v374
        %380 = vadd.xlane.f32.xlu0 %v376
        %v381 = vpop.xlane.xlu0 %380
        %382 = vadd.xlane.f32.xlu0 %v377
        %v383 = vpop.xlane.xlu0 %382
        %384 = vadd.xlane.f32.xlu0 %v378
        %v385 = vpop.xlane.xlu0 %384
        %386 = vadd.xlane.f32.xlu0 %v379
        %v387 = vpop.xlane.xlu0 %386
        %s388 = ssub.f32 0.0, %s277
        %v389 = vstv %s388
        %v390 = vmul.f32 %v389, %v381
        %v391 = vmul.f32 %v389, %v383
        %v392 = vmul.f32 %v389, %v385
        %v393 = vmul.f32 %v389, %v387
        %v394 = vmax.f32 %v390, %v391
        %v395 = vmax.f32 %v392, %v393
        %v396 = vmax.f32 %v394, %v395
        %v397 = vrot.slane %v396, 4
        %v398 = vmax.f32 %v396, %v397
        %v399 = vrot.slane %v398, 2
        %v400 = vmax.f32 %v398, %v399
        %v401 = vrot.slane %v400, 1
        %v402 = vmax.f32 %v400, %v401
        %v403 = vsub.f32 %v390, %v402
        %v404 = vsub.f32 %v391, %v402
        %v405 = vsub.f32 %v392, %v402
        %v406 = vsub.f32 %v393, %v402
        %v407 = vmul.f32 %v403, 1.442695
        %v408 = vpow.pop %v407
        %v409 = vmul.f32 %v404, 1.442695
        %v410 = vpow.pop %v409
        %v411 = vmul.f32 %v405, 1.442695
        %v412 = vpow.pop %v411
        %v413 = vmul.f32 %v406, 1.442695
        %v414 = vpow.pop %v413
        %v415 = vadd.f32 %v408, %v410
        %v416 = vadd.f32 %v415, %v412
        %v417 = vadd.f32 %v416, %v414
        %v418 = vrot.slane %v417, 4
        %v419 = vadd.f32 %v417, %v418
        %v420 = vrot.slane %v419, 2
        %v421 = vadd.f32 %v419, %v420
        %v422 = vrot.slane %v421, 1
        %v423 = vadd.f32 %v421, %v422
        %v424 = vld [vmem:[%s274] sm:$0xff]
        %v425 = vld [vmem:[%s274 + $0x8] sm:$0xff]
        %v426 = vld [vmem:[%s274 + $0x10] sm:$0xff]
        %v427 = vld [vmem:[%s274 + $0x18] sm:$0xff]
        %v428 = vmul.f32 %v408, %v424
        %v429 = vmul.f32 %v410, %v425
        %v430 = vmul.f32 %v412, %v426
        %v431 = vmul.f32 %v414, %v427
        %vm432 = vcmask 7168
        %v433 = vsel %vm432, %v428, 0.0
        %v434 = vsel %vm432, %v429, 0.0
        %v435 = vadd.f32 %v433, %v434
        %v436 = vsel %vm432, %v430, 0.0
        %v437 = vadd.f32 %v435, %v436
        %v438 = vsel %vm432, %v431, 0.0
        %v439 = vadd.f32 %v437, %v438
        %v440 = vrot.slane %v439, 4
        %v441 = vadd.f32 %v439, %v440
        %v442 = vrot.slane %v441, 2
        %v443 = vadd.f32 %v441, %v442
        %v444 = vrot.slane %v443, 1
        %v445 = vadd.f32 %v443, %v444
        %v446 = vlog2.pop %v445
        %v447 = vmul.f32 %v446, 0.6931472
        %v448 = vlog2.pop %v423
        %v449 = vmul.f32 %v448, 0.6931472
        %v450 = vsub.f32 %v447, %v449
        %v451 = vstv %s278
        %v452 = vmul.f32 %v451, %v450
        %v453 = vmul.f32 %v452, 1.442695
        %v454 = vpow.pop %v453
        %v455 = vlaneseq
        %v456 = vand.u32 %v455, 127
        %p457 = scmp.eq.s32.totalorder %s19, 0
        // Predicated region
        $region49: #{tpu_custom_call.1} parent=43 // pred_check
          %p458 = pneg %p457
        $region50: #{tpu_custom_call.1} parent=43 // pred_check_branch
          %460 = sbr.rel (%p458) target = $region52
        $region51: #{tpu_custom_call.1} parent=43 // pred_region
          %461 = vst [vmem:[#allocation5] sm:$0xff] 0.0
        $region52: #{tpu_custom_call.1} parent=43 // pred_fallthru
          _
        %v462 = vld [vmem:[#allocation5] sm:$0xff]
        %v463 = vstv %s19
        %vm464 = vcmp.eq.s32.totalorder %v456, %v463
        %v465 = vsel %vm464, 1, 0
        %v466 = vcvt.s32.f32 %v465
        %468 = vset.pattern.permute.xlu0 0
        %469 = vperm.xlu0 %468, %v454
        %v470 = vpop.permute.xlu0 %469
        %v472 = vmul.f32 %v470, %v466
        %v473 = vadd.f32 %v462, %v472
        %474 = vst [vmem:[#allocation5] sm:$0xff] %v473
        // Predicated region
        $region53: #{tpu_custom_call.1} parent=43 // pred_check
          %p475 = pneg %p168
        $region54: #{tpu_custom_call.1} parent=43 // pred_check_branch
          %477 = sbr.rel (%p475) target = $region56
        $region55: #{tpu_custom_call.1} parent=43 // pred_region
          %s479 = ssub.s32 128, 128
          %480 = vsyncadd [#allocation3], %s479
          %s482 = sshll.u32 [#allocation5], 4
          %s483 = int_to_ptr.vmem [resolvable:$true] %s482
          %485 = dma.vmem_to_hbm [thread:$0]  %s483, 128, %s6, [#allocation3]
        $region56: #{tpu_custom_call.1} parent=43 // pred_fallthru
          _
        // Predicated region
        $region57: #{tpu_custom_call.1} parent=43 // pred_check
          %p486 = pneg %p168
        $region58: #{tpu_custom_call.1} parent=43 // pred_check_branch
          %488 = sbr.rel (%p486) target = $region60
        $region59: #{tpu_custom_call.1} parent=43 // pred_region
          %489 = dma.done [#allocation3], 128
        $region60: #{tpu_custom_call.1} parent=43 // pred_fallthru
          _
      $region44: #{tpu_custom_call.1} parent=5 // pred_fallthru
        _
      %p490 = scmp.le.s32.totalorder 2, %s14
      // Predicated region
      $region61: #{tpu_custom_call.1} parent=5 // pred_check
        %p491 = pneg %p490
      $region62: #{tpu_custom_call.1} parent=5 // pred_check_branch
        %493 = sbr.rel (%p491) target = $region64
      $region63: #{tpu_custom_call.1} parent=5 // pred_region
        %s494 = ssub.s32 %s14, 2
      $region64: #{tpu_custom_call.1} parent=5 // pred_fallthru
        _
    $region6: #{tpu_custom_call.1} parent=1 // loop_footer
      %s18 = sadd.s32 1, %s14
    $region7: #{tpu_custom_call.1} parent=1 // loop_footer_branch
      %13 = sbr.rel target = $region3
    $region8: #{tpu_custom_call.1} parent=1 // loop_exit
      _
    %495 = vsyncpa [#allocation3], 1
    %s496 = scalar_lea.sflag [#allocation3], 1
    %497 = vsyncpa %s496, 1
    %498 = vsyncpa [#allocation4], 1
    %s499 = scalar_lea.sflag [#allocation4], 1
    %500 = vsyncpa %s499, 1

</llo_original>
